<compile_context>
chip_gen: v7x
topology: tpu7x:2x2x1
jax: 0.10.0
libtpu: 0.0.40
codegen_flags: <defaults>
</compile_context>

<pallas_src>
import functools
import math

import jax
import jax.numpy as jnp
from jax.experimental import pallas as pl
from jax.experimental.pallas import tpu as pltpu


LANE = 128     # vreg lane width: feature dims padded to multiples of this.
SUBLANE = 8    # sublane width: batch blocks padded to multiples of this.


def _round_up(n, m):
    return ((n + m - 1) // m) * m


def _num_tensorcores():
    """2 TensorCores per chip on v7x, 1 on v5e/v6e. Best-effort detection."""
    try:
        kind = jax.devices()[0].device_kind.lower()
        return 2 if "v7" in kind else 1
    except Exception:
        return 1


def _apply_act(y, act):
    if act == "relu":
        return jnp.maximum(y, 0.0)
    if act == "tanh":
        return jnp.tanh(y)
    if act == "sigmoid":
        return jax.nn.sigmoid(y)
    raise ValueError(f"unknown activation: {act}")


# ------------------------------- Pallas kernel --------------------------------
def _mlp_fused_kernel(*refs, act, n_layers):
    """Fused MLP:  y = act(...act(act(x @ W0 + b0) @ W1 + b1)...)

    refs = (x_ref, w0_ref, b0_ref, w1_ref, b1_ref, ..., o_ref)
    All intermediates stay on-chip (vregs / VMEM); the only HBM store is the final
    result, and only its TRUE columns are written (no padded-column write + re-slice).
    """
    x_ref = refs[0]
    o_ref = refs[-1]
    y = x_ref[...]
    for i in range(n_layers):
        w_ref = refs[1 + 2 * i]
        b_ref = refs[2 + 2 * i]
        y = jnp.dot(y, w_ref[...], preferred_element_type=jnp.float32) + b_ref[...]
        y = _apply_act(y, act)
    # Single store of the true output width; dtype cast happens once here.
    o_ref[...] = y[:, : o_ref.shape[1]].astype(o_ref.dtype)


def mlp_forward_fused(x, params_pad, *, act, out_width,
                      num_cores=1, gridless_max_rows=2048):
    """Fused MLP forward.

    x:           (B, n_in) f32
    params_pad:  list of (W, b), W:(K_pad_in, N_pad), b:(1, N_pad), zero-padded to
                 128-multiples on the feature axes (zero ROWS for padded inputs —
                 see padding invariant at the top of this file).
    out_width:   true (unpadded) width of the last layer; the kernel writes exactly
                 this many columns.
    """
    B, K = x.shape
    n_layers = len(params_pad)

    flat = []
    for w, b in params_pad:
        flat.append(w)
        flat.append(b)

    kernel = functools.partial(_mlp_fused_kernel, act=act, n_layers=n_layers)

    # ---- choose execution shape (per-generation batching heuristics) ----------
    batch_block = None
    if num_cores >= 2 and B > 512:
        # v7x: exactly num_cores grid steps (or the smallest multiple that keeps
        # per-step rows <= gridless_max_rows) — fill both cores, minimal step overhead.
        n_steps = num_cores
        while pl.cdiv(B, n_steps) > gridless_max_rows:
            n_steps += num_cores
        batch_block = _round_up(pl.cdiv(B, n_steps), SUBLANE)
    elif B > gridless_max_rows:
        # single-TC: only tile when the whole problem would be uncomfortably large
        # in one VMEM-resident invocation; use few, big steps.
        n_steps = pl.cdiv(B, gridless_max_rows)
        batch_block = _round_up(pl.cdiv(B, n_steps), SUBLANE)

    if batch_block is None:
        # Gridless path: the whole (tiny) problem lives in VMEM; one kernel
        # invocation, zero grid/pipeline bookkeeping. 64 MiB VMEM limit covers the
        # v5e 16-MiB scoped default without touching v7x's 64-MiB physical ceiling.
        vmem = pl.BlockSpec(memory_space=pltpu.MemorySpace.VMEM)
        return pl.pallas_call(
            kernel,
            out_shape=jax.ShapeDtypeStruct((B, out_width), x.dtype),
            in_specs=[vmem] * (1 + 2 * n_layers),
            out_specs=vmem,
            compiler_params=pltpu.CompilerParams(vmem_limit_bytes=64 << 20),
        )(x, *flat)

    # Batch-tiled grid path. Non-divisible B is handled by zero-padding rows in the
    # wrapper (bounded VMEM regardless of B) and slicing back under the same jit.
    n_steps = pl.cdiv(B, batch_block)
    b_pad = n_steps * batch_block
    x_p = x if b_pad == B else jnp.pad(x, ((0, b_pad - B), (0, 0)))

    in_specs = [pl.BlockSpec((batch_block, K), lambda i: (i, 0))]
    for w, b in params_pad:
        # Weights/biases are block-resident (same block index every step): DMA'd once.
        in_specs.append(pl.BlockSpec(w.shape, lambda i: (0, 0)))
        in_specs.append(pl.BlockSpec(b.shape, lambda i: (0, 0)))

    out = pl.pallas_call(
        kernel,
        out_shape=jax.ShapeDtypeStruct((b_pad, out_width), x.dtype),
        grid=(n_steps,),
        in_specs=in_specs,
        out_specs=pl.BlockSpec((batch_block, out_width), lambda i: (i, 0)),
        compiler_params=pltpu.CompilerParams(
            dimension_semantics=("parallel",),   # shards steps across TCs on v7x
            vmem_limit_bytes=64 << 20,
        ),
    )(x_p, *flat)
    return out if b_pad == B else out[:B]


# ------------------------------- MLP module ------------------------------------
class MLP:
    """JAX/Pallas port of the PyTorch MLP (forward pass only, eval mode)."""

    def __init__(self, n_in, n_hidden, drop_p, n_out, act, key):
        self.n_in = n_in
        self.n_hidden = list(n_hidden)
        self.n_out = n_out
        self.p = drop_p
        self.act = act
        self.out_width = self.n_hidden[-1]

        # Deterministic init mimicking PyTorch nn.Linear default:
        # U(-1/sqrt(fan_in), 1/sqrt(fan_in)) for both W and b.
        dims = [n_in] + self.n_hidden
        self.params_true = []   # unpadded, for the pure-JAX reference
        self.params_pad = []    # zero-padded to 128-multiples, for the Pallas kernel
        in_pad = n_in           # input feature dim left unpadded (it is the matmul K dim)
        for i in range(len(dims) - 1):
            fan_in, fan_out = dims[i], dims[i + 1]
            out_pad = _round_up(fan_out, LANE)
            key, kw, kb = jax.random.split(key, 3)
            bound = 1.0 / math.sqrt(fan_in)
            w = jax.random.uniform(kw, (fan_in, fan_out), jnp.float32, -bound, bound)
            b = jax.random.uniform(kb, (fan_out,), jnp.float32, -bound, bound)
            self.params_true.append((w, b))

            # PADDING INVARIANT: padded weight ROWS (input side) must stay zero so
            # that nonzero padded activations from the previous layer (e.g.
            # sigmoid(0)=0.5) contribute nothing. Padded COLUMNS are zero too; the
            # kernel never stores them.
            w_pad = jnp.zeros((in_pad, out_pad), jnp.float32).at[:fan_in, :fan_out].set(w)
            b_pad = jnp.zeros((1, out_pad), jnp.float32).at[0, :fan_out].set(b)
            self.params_pad.append((w_pad, b_pad))
            in_pad = out_pad

        # final_fc exists in __init__ but is never used in forward(); kept for parity.
        key, kw, kb = jax.random.split(key, 3)
        bound = 1.0 / math.sqrt(self.n_hidden[-1])
        self.final_fc = (
            jax.random.uniform(kw, (self.n_hidden[-1], n_out), jnp.float32, -bound, bound),
            jax.random.uniform(kb, (n_out,), jnp.float32, -bound, bound),
        )

        # One fused jit-compiled executable per model: kernel + (optional) row
        # un-padding, no separate XLA slice kernel, one dispatch per forward.
        self._fwd = jax.jit(functools.partial(
            mlp_forward_fused,
            act=self.act,
            out_width=self.out_width,
            num_cores=_num_tensorcores(),
        ))

    def forward(self, x):
        # X = nonlin(input_layer(X)); then (Linear, nonlin, Dropout) blocks.
        # TODO(synk): nn.Dropout is identity at inference; training-mode dropout
        # (PRNG masking/scaling) is intentionally not implemented in the kernel.
        return self._fwd(x, self.params_pad)

    # Pure-JAX reference (unpadded weights) for a correctness check.
    def forward_ref(self, x):
        act_fn = {"relu": lambda v: jnp.maximum(v, 0.0),
                  "tanh": jnp.tanh,
                  "sigmoid": jax.nn.sigmoid}[self.act]
        for (w, b) in self.params_true:
            x = act_fn(x @ w + b)
        return x


# --------------------------------- driver ---------------------------------------
if __name__ == "__main__":
    key = jax.random.PRNGKey(0)

    n_in = 32
    n_hidden = [64, 32]
    n_out = 10
    drop_p = 0.5

    # 1) Small-batch fused gridless path, all three activations (checks that the
    #    128-lane padding + in-kernel column slice is harmless for relu/tanh/sigmoid).
    batch = 128
    for act in ("relu", "tanh", "sigmoid"):
        key, kx, kp = jax.random.split(key, 3)
        model = MLP(n_in, n_hidden, drop_p, n_out, act, kp)
        x = jax.random.normal(kx, (batch, n_in), jnp.float32)

        out = jax.block_until_ready(model.forward(x))
        ref = model.forward_ref(x)
        assert out.shape == (batch, n_hidden[-1])
        assert jnp.allclose(out, ref, atol=1e-5, rtol=1e-5), f"mismatch for act={act}"

    # 2) Larger batch: gridless single dispatch on v5e/v6e, 2-step 'parallel' grid
    #    (one step per TensorCore) on v7x.
    key, kx, kp = jax.random.split(key, 3)
    model = MLP(n_in, n_hidden, drop_p, n_out, "relu", kp)
    x_big = jax.random.normal(kx, (1024, n_in), jnp.float32)
    out_big = jax.block_until_ready(model.forward(x_big))
    ref_big = model.forward_ref(x_big)
    assert out_big.shape == (1024, n_hidden[-1])
    assert jnp.allclose(out_big, ref_big, atol=1e-5, rtol=1e-5), "mismatch (1024-row path)"

    # 3) Non-divisible large batch: exercises the row-padded, batch-tiled grid path
    #    (bounded per-step VMEM regardless of B) and the under-jit row un-slice.
    key, kx, kp = jax.random.split(key, 3)
    model = MLP(n_in, n_hidden, drop_p, n_out, "tanh", kp)
    x_rag = jax.random.normal(kx, (2500, n_in), jnp.float32)
    out_rag = jax.block_until_ready(model.forward(x_rag))
    ref_rag = model.forward_ref(x_rag)
    assert out_rag.shape == (2500, n_hidden[-1])
    assert jnp.allclose(out_rag, ref_rag, atol=1e-5, rtol=1e-5), "mismatch (ragged path)"

    print("KERNEL_OK")
</pallas_src>

<mosaic_0001>
module attributes {stable_mosaic.version = 11 : i64} {
  func.func @_mlp_fused_kernel(%arg0: memref<128x32xf32, #tpu.memory_space<vmem>>, %arg1: memref<32x128xf32, #tpu.memory_space<vmem>>, %arg2: memref<1x128xf32, #tpu.memory_space<vmem>>, %arg3: memref<128x128xf32, #tpu.memory_space<vmem>>, %arg4: memref<1x128xf32, #tpu.memory_space<vmem>>, %arg5: memref<128x32xf32, #tpu.memory_space<vmem>>) attributes {dimension_semantics = [], scalar_prefetch = 0 : i64, scratch_operands = 0 : i64, tpu.core_type = #tpu.core_type<tc>} {
    %c0 = arith.constant 0 : index
    %c0_0 = arith.constant 0 : index
    %0 = vector.load %arg0[%c0, %c0_0] : memref<128x32xf32, #tpu.memory_space<vmem>>, vector<128x32xf32>
    %c0_1 = arith.constant 0 : index
    %c0_2 = arith.constant 0 : index
    %1 = vector.load %arg1[%c0_1, %c0_2] : memref<32x128xf32, #tpu.memory_space<vmem>>, vector<32x128xf32>
    %cst = arith.constant dense<0.000000e+00> : vector<128x128xf32>
    %2 = tpu.matmul %0, %1, %cst {dimension_numbers = #tpu.dot_dimension_numbers<[1], [0], [0], [1], [0, 0, 1, 1], [], []>} : vector<128x32xf32>, vector<32x128xf32>, vector<128x128xf32> -> vector<128x128xf32>
    %c0_3 = arith.constant 0 : index
    %c0_4 = arith.constant 0 : index
    %3 = vector.load %arg2[%c0_3, %c0_4] : memref<1x128xf32, #tpu.memory_space<vmem>>, vector<1x128xf32>
    %4 = vector.broadcast %3 : vector<1x128xf32> to vector<128x128xf32>
    %5 = arith.addf %2, %4 : vector<128x128xf32>
    %cst_5 = arith.constant 0.000000e+00 : f32
    %6 = vector.broadcast %cst_5 : f32 to vector<128x128xf32>
    %7 = arith.maximumf %5, %6 : vector<128x128xf32>
    %c0_6 = arith.constant 0 : index
    %c0_7 = arith.constant 0 : index
    %8 = vector.load %arg3[%c0_6, %c0_7] : memref<128x128xf32, #tpu.memory_space<vmem>>, vector<128x128xf32>
    %cst_8 = arith.constant dense<0.000000e+00> : vector<128x128xf32>
    %9 = tpu.matmul %7, %8, %cst_8 {dimension_numbers = #tpu.dot_dimension_numbers<[1], [0], [0], [1], [0, 0, 1, 1], [], []>} : vector<128x128xf32>, vector<128x128xf32>, vector<128x128xf32> -> vector<128x128xf32>
    %c0_9 = arith.constant 0 : index
    %c0_10 = arith.constant 0 : index
    %10 = vector.load %arg4[%c0_9, %c0_10] : memref<1x128xf32, #tpu.memory_space<vmem>>, vector<1x128xf32>
    %11 = vector.broadcast %10 : vector<1x128xf32> to vector<128x128xf32>
    %12 = arith.addf %9, %11 : vector<128x128xf32>
    %cst_11 = arith.constant 0.000000e+00 : f32
    %13 = vector.broadcast %cst_11 : f32 to vector<128x128xf32>
    %14 = arith.maximumf %12, %13 : vector<128x128xf32>
    %15 = vector.extract_strided_slice %14 {offsets = [0, 0], sizes = [128, 32], strides = [1, 1]} : vector<128x128xf32> to vector<128x32xf32>
    %c0_12 = arith.constant 0 : index
    %c0_13 = arith.constant 0 : index
    %16 = vector.load %arg5[%c0_12, %c0_13] : memref<128x32xf32, #tpu.memory_space<vmem>>, vector<128x32xf32>
    tpu.vector_store %arg5[%c0_12, %c0_13], %15 {strides = array<i32>} : memref<128x32xf32, #tpu.memory_space<vmem>>, vector<128x32xf32>,
    return
  }
}

</mosaic_0001>

<llo_original>
// kernel: mlp_forward_fused.1
$region0: #{mlp_forward_fused.1}
  #allocation0 [shape = 'u32[]', space=smem, size = 0x4, offset = 0x4, fixed_abs, tag = 'smem constant byte address 0x4 - core index']
  #allocation1 [shape = 'u32[144,128]{1,0:T(1,128)}', space=vmem, size = 0x12000, scoped, tag = 'internal scratch']
  %s0 = inlined_call_operand.hbm [shape: f32[128,32], index: 0, kind: input, shape index: {}]
  %s1 = inlined_call_operand.hbm [shape: f32[32,128], index: 1, kind: input, shape index: {}]
  %s2 = inlined_call_operand.hbm [shape: f32[1,128], index: 2, kind: input, shape index: {}]
  %s3 = inlined_call_operand.hbm [shape: f32[128,128], index: 3, kind: input, shape index: {}]
  %s4 = inlined_call_operand.hbm [shape: f32[1,128], index: 4, kind: input, shape index: {}]
  %s5 = inlined_call_operand.hbm [shape: f32[128,32], index: 5, kind: output, shape index: {}]
  %s6 = sld [smem:[#allocation0]]
  $region50: #{mlp_forward_fused.1} parent=0
    _
  %s8 = ssub.s32 1, %s6
  %s9 = scalar_select 0, %s8, %s6
  $region1: #{mlp_forward_fused.1} parent=0
    #allocation2 [shape = 'u8[65536]{0}', space=vmem, size = 0x10000, scoped, tag = 'input window, operand 0, single buffered']
    #allocation3 [shape = 's32[1]{0}', space=sflag, size = 0x4, scoped, tag = 'scoped memory for mlp_forward_fused.1']
    #allocation4 [shape = 's32[1]{0}', space=sflag, size = 0x4, scoped, tag = 'scoped memory for mlp_forward_fused.1']
    #allocation5 [shape = 'u8[16384]{0}', space=vmem, size = 0x4000, scoped, tag = 'input window, operand 1, single buffered']
    #allocation6 [shape = 's32[1]{0}', space=sflag, size = 0x4, scoped, tag = 'scoped memory for mlp_forward_fused.1']
    #allocation7 [shape = 'u8[512]{0}', space=vmem, size = 0x400, scoped, tag = 'input window, operand 2, single buffered']
    #allocation8 [shape = 'u8[65536]{0}', space=vmem, size = 0x10000, scoped, tag = 'input window, operand 3, single buffered']
    #allocation9 [shape = 's32[1]{0}', space=sflag, size = 0x4, scoped, tag = 'scoped memory for mlp_forward_fused.1']
    #allocation10 [shape = 'u8[512]{0}', space=vmem, size = 0x400, scoped, tag = 'input window, operand 4, single buffered']
    #allocation11 [shape = 'u8[65536]{0}', space=vmem, size = 0x10000, scoped, tag = 'output window, operand 0, single buffered']
    %10 = vsyncpa [#allocation3], 0
    %11 = vsyncpa [#allocation6], 0
    %12 = vsyncpa [#allocation9], 0
    %13 = vsyncpa [#allocation4], 0
    // Predicated region
    $region2: #{mlp_forward_fused.1} parent=1 // pred_check
      _
    $region3: #{mlp_forward_fused.1} parent=1 // pred_check_branch
      %15 = sbr.rel (0) target = $region5
    $region4: #{mlp_forward_fused.1} parent=1 // pred_region
      %s17 = ssub.s32 2048, 2048
      %18 = vsyncadd [#allocation3], %s17
      %s19 = sshll.u32 [#allocation2], 4
      %s20 = int_to_ptr.vmem [resolvable:$true] %s19
      %25 = dma.hbm_to_vmem [thread:$0]  %s0, 2048, %s20, [#allocation3], 128, 128, 8
    $region5: #{mlp_forward_fused.1} parent=1 // pred_fallthru
      _
    // Predicated region
    $region6: #{mlp_forward_fused.1} parent=1 // pred_check
      _
    $region7: #{mlp_forward_fused.1} parent=1 // pred_check_branch
      %27 = sbr.rel (0) target = $region9
    $region8: #{mlp_forward_fused.1} parent=1 // pred_region
      %s29 = ssub.s32 512, 512
      %30 = vsyncadd [#allocation6], %s29
      %s31 = sshll.u32 [#allocation5], 4
      %s32 = int_to_ptr.vmem [resolvable:$true] %s31
      %37 = dma.hbm_to_vmem [thread:$0]  %s1, 512, %s32, [#allocation6], 128, 128, 8
    $region9: #{mlp_forward_fused.1} parent=1 // pred_fallthru
      _
    // Predicated region
    $region10: #{mlp_forward_fused.1} parent=1 // pred_check
      _
    $region11: #{mlp_forward_fused.1} parent=1 // pred_check_branch
      %39 = sbr.rel (0) target = $region13
    $region12: #{mlp_forward_fused.1} parent=1 // pred_region
      %s41 = ssub.s32 16, 16
      %42 = vsyncadd [#allocation6], %s41
      %s44 = sshll.u32 [#allocation7], 4
      %s45 = int_to_ptr.vmem [resolvable:$true] %s44
      %47 = dma.hbm_to_vmem [thread:$0]  %s2, 16, %s45, [#allocation6]
    $region13: #{mlp_forward_fused.1} parent=1 // pred_fallthru
      _
    // Predicated region
    $region14: #{mlp_forward_fused.1} parent=1 // pred_check
      _
    $region15: #{mlp_forward_fused.1} parent=1 // pred_check_branch
      %49 = sbr.rel (0) target = $region17
    $region16: #{mlp_forward_fused.1} parent=1 // pred_region
      %s51 = ssub.s32 2048, 2048
      %52 = vsyncadd [#allocation9], %s51
      %s53 = sshll.u32 [#allocation8], 4
      %s54 = int_to_ptr.vmem [resolvable:$true] %s53
      %59 = dma.hbm_to_vmem [thread:$0]  %s3, 2048, %s54, [#allocation9], 128, 128, 8
    $region17: #{mlp_forward_fused.1} parent=1 // pred_fallthru
      _
    // Predicated region
    $region18: #{mlp_forward_fused.1} parent=1 // pred_check
      _
    $region19: #{mlp_forward_fused.1} parent=1 // pred_check_branch
      %61 = sbr.rel (0) target = $region21
    $region20: #{mlp_forward_fused.1} parent=1 // pred_region
      %s63 = ssub.s32 16, 16
      %64 = vsyncadd [#allocation9], %s63
      %s66 = sshll.u32 [#allocation10], 4
      %s67 = int_to_ptr.vmem [resolvable:$true] %s66
      %69 = dma.hbm_to_vmem [thread:$0]  %s4, 16, %s67, [#allocation9]
    $region21: #{mlp_forward_fused.1} parent=1 // pred_fallthru
      _
    // Predicated region
    $region22: #{mlp_forward_fused.1} parent=1 // pred_check
      _
    $region23: #{mlp_forward_fused.1} parent=1 // pred_check_branch
      %71 = sbr.rel (0) target = $region25
    $region24: #{mlp_forward_fused.1} parent=1 // pred_region
      %72 = dma.done [#allocation3], 2048
    $region25: #{mlp_forward_fused.1} parent=1 // pred_fallthru
      _
    // Predicated region
    $region26: #{mlp_forward_fused.1} parent=1 // pred_check
      _
    $region27: #{mlp_forward_fused.1} parent=1 // pred_check_branch
      %74 = sbr.rel (0) target = $region29
    $region28: #{mlp_forward_fused.1} parent=1 // pred_region
      %75 = dma.done [#allocation6], 512
    $region29: #{mlp_forward_fused.1} parent=1 // pred_fallthru
      _
    // Predicated region
    $region30: #{mlp_forward_fused.1} parent=1 // pred_check
      _
    $region31: #{mlp_forward_fused.1} parent=1 // pred_check_branch
      %77 = sbr.rel (0) target = $region33
    $region32: #{mlp_forward_fused.1} parent=1 // pred_region
      %78 = dma.done [#allocation6], 16
    $region33: #{mlp_forward_fused.1} parent=1 // pred_fallthru
      _
    // Predicated region
    $region34: #{mlp_forward_fused.1} parent=1 // pred_check
      _
    $region35: #{mlp_forward_fused.1} parent=1 // pred_check_branch
      %80 = sbr.rel (0) target = $region37
    $region36: #{mlp_forward_fused.1} parent=1 // pred_region
      %81 = dma.done [#allocation9], 2048
    $region37: #{mlp_forward_fused.1} parent=1 // pred_fallthru
      _
    // Predicated region
    $region38: #{mlp_forward_fused.1} parent=1 // pred_check
      _
    $region39: #{mlp_forward_fused.1} parent=1 // pred_check_branch
      %83 = sbr.rel (0) target = $region41
    $region40: #{mlp_forward_fused.1} parent=1 // pred_region
      %84 = dma.done [#allocation9], 16
    $region41: #{mlp_forward_fused.1} parent=1 // pred_fallthru
      _
    %v85 = vld [vmem:[#allocation2] sm:$0xff]
    %v86 = vld [vmem:[#allocation2 + $0x8] sm:$0xff]
    %v87 = vld [vmem:[#allocation2 + $0x10] sm:$0xff]
    %v88 = vld [vmem:[#allocation2 + $0x18] sm:$0xff]
    %v89 = vld [vmem:[#allocation2 + $0x20] sm:$0xff]
    %v90 = vld [vmem:[#allocation2 + $0x28] sm:$0xff]
    %v91 = vld [vmem:[#allocation2 + $0x30] sm:$0xff]
    %v92 = vld [vmem:[#allocation2 + $0x38] sm:$0xff]
    %v93 = vld [vmem:[#allocation2 + $0x40] sm:$0xff]
    %v94 = vld [vmem:[#allocation2 + $0x48] sm:$0xff]
    %v95 = vld [vmem:[#allocation2 + $0x50] sm:$0xff]
    %v96 = vld [vmem:[#allocation2 + $0x58] sm:$0xff]
    %v97 = vld [vmem:[#allocation2 + $0x60] sm:$0xff]
    %v98 = vld [vmem:[#allocation2 + $0x68] sm:$0xff]
    %v99 = vld [vmem:[#allocation2 + $0x70] sm:$0xff]
    %v100 = vld [vmem:[#allocation2 + $0x78] sm:$0xff]
    %v101 = vld [vmem:[#allocation5] sm:$0xff]
    %v102 = vld [vmem:[#allocation5 + $0x8] sm:$0xff]
    %v103 = vld [vmem:[#allocation5 + $0x10] sm:$0xff]
    %v104 = vld [vmem:[#allocation5 + $0x18] sm:$0xff]
    %v105 = vld [vmem:[#allocation7] sm:$0x1]
    %v107 = vlaneseq
    %v108 = vshrl.u32 %v107, 7
    %v109 = vsub.s32 0, %v108
    %v110 = vrot.slane %v105, %v109
    %vm112 = vcmask 261120
    %v114 = vsel %vm112, %v85, 0
    %v117 = vsel %vm112, %v86, 0
    %v120 = vsel %vm112, %v87, 0
    %v123 = vsel %vm112, %v88, 0
    %v126 = vsel %vm112, %v89, 0
    %v129 = vsel %vm112, %v90, 0
    %v132 = vsel %vm112, %v91, 0
    %v135 = vsel %vm112, %v92, 0
    %v138 = vsel %vm112, %v93, 0
    %v141 = vsel %vm112, %v94, 0
    %v144 = vsel %vm112, %v95, 0
    %v147 = vsel %vm112, %v96, 0
    %v150 = vsel %vm112, %v97, 0
    %v153 = vsel %vm112, %v98, 0
    %v156 = vsel %vm112, %v99, 0
    %v159 = vsel %vm112, %v100, 0
    %161 = vmatprep.subr.mxu0 0.0
    %162 = vmatpush1.msra.mxu0 %v101
    %163 = vmatprep.subr.mxu0 0.0
    %164 = vmatpush1.msra.mxu0 %v102
    %165 = vmatprep.subr.mxu0 0.0
    %166 = vmatpush1.msra.mxu0 %v103
    %167 = vmatprep.subr.mxu0 0.0
    %168 = vmatpush1.msra.mxu0 %v104
    %169 = vmatprep.subr.mxu0 0.0
    %170 = vmatpush1.msra.mxu0 0.0
    %171 = vmatprep.subr.mxu0 0.0
    %172 = vmatpush1.msra.mxu0 0.0
    %173 = vmatprep.subr.mxu0 0.0
    %174 = vmatpush1.msra.mxu0 0.0
    %175 = vmatprep.subr.mxu0 0.0
    %176 = vmatpush1.msra.mxu0 0.0
    %177 = vmatprep.subr.mxu0 0.0
    %178 = vmatpush1.msra.mxu0 0.0
    %179 = vmatprep.subr.mxu0 0.0
    %180 = vmatpush1.msra.mxu0 0.0
    %181 = vmatprep.subr.mxu0 0.0
    %182 = vmatpush1.msra.mxu0 0.0
    %183 = vmatprep.subr.mxu0 0.0
    %184 = vmatpush1.msra.mxu0 0.0
    %185 = vmatprep.subr.mxu0 0.0
    %186 = vmatpush1.msra.mxu0 0.0
    %187 = vmatprep.subr.mxu0 0.0
    %188 = vmatpush1.msra.mxu0 0.0
    %189 = vmatprep.subr.mxu0 0.0
    %190 = vmatpush1.msra.mxu0 0.0
    %191 = vmatprep.subr.mxu0 0.0
    %192 = vmatpush1.msra.mxu0 0.0
    %193 = vmatprep.subr.mxu0 0.0
    %194 = vmatpush1.msra.mxu0 0.0
    %195 = vmatprep.subr.mxu0 0.0
    %196 = vmatpush1.msra.mxu0 0.0
    %197 = vmatprep.subr.mxu0 0.0
    %198 = vmatpush1.msra.mxu0 0.0
    %199 = vmatprep.subr.mxu0 0.0
    %200 = vmatpush1.msra.mxu0 0.0
    %201 = vmatprep.subr.mxu0 0.0
    %202 = vmatpush1.msra.mxu0 0.0
    %203 = vmatprep.subr.mxu0 0.0
    %204 = vmatpush1.msra.mxu0 0.0
    %205 = vmatprep.subr.mxu0 0.0
    %206 = vmatpush1.msra.mxu0 0.0
    %207 = vmatprep.subr.mxu0 0.0
    %208 = vmatpush1.msra.mxu0 0.0
    %209 = vmatprep.subr.mxu0 0.0
    %210 = vmatpush1.msra.mxu0 0.0
    %211 = vmatprep.subr.mxu0 0.0
    %212 = vmatpush1.msra.mxu0 0.0
    %213 = vmatprep.subr.mxu0 0.0
    %214 = vmatpush1.msra.mxu0 0.0
    %215 = vmatprep.subr.mxu0 0.0
    %216 = vmatpush1.msra.mxu0 0.0
    %217 = vmatprep.subr.mxu0 0.0
    %218 = vmatpush1.msra.mxu0 0.0
    %219 = vmatprep.subr.mxu0 0.0
    %220 = vmatpush1.msra.mxu0 0.0
    %221 = vmatprep.subr.mxu0 0.0
    %222 = vmatpush1.msra.mxu0 0.0
    %223 = vmatprep.subr.mxu0 0.0
    %224 = vmatpush1.msra.mxu0 0.0
    %225 = vmatprep.mubr.f32.mxu0 0.0
    %226 = vmatmul.mubr.f32.gmra.mrb[0].mxu0 %v114
    %v227 = vpop.f32.mrb[0].mxu0
    %v228 = vadd.f32 %v110, %v227
    %v229 = vpop.f32.mrb[0].mxu0
    %230 = vmatprep.mubr.f32.mxu0 0.0
    %231 = vmatmul.mubr.f32.gmra.mrb[0].mxu0 %v117
    %v232 = vpop.f32.mrb[0].mxu0
    %v233 = vadd.f32 %v110, %v232
    %v234 = vpop.f32.mrb[0].mxu0
    %235 = vmatprep.mubr.f32.mxu0 0.0
    %236 = vmatmul.mubr.f32.gmra.mrb[0].mxu0 %v120
    %v237 = vpop.f32.mrb[0].mxu0
    %v238 = vadd.f32 %v110, %v237
    %v239 = vpop.f32.mrb[0].mxu0
    %240 = vmatprep.mubr.f32.mxu0 0.0
    %241 = vmatmul.mubr.f32.gmra.mrb[0].mxu0 %v123
    %v242 = vpop.f32.mrb[0].mxu0
    %v243 = vadd.f32 %v110, %v242
    %v244 = vpop.f32.mrb[0].mxu0
    %245 = vmatprep.mubr.f32.mxu0 0.0
    %246 = vmatmul.mubr.f32.gmra.mrb[0].mxu0 %v126
    %v247 = vpop.f32.mrb[0].mxu0
    %v248 = vadd.f32 %v110, %v247
    %v249 = vpop.f32.mrb[0].mxu0
    %250 = vmatprep.mubr.f32.mxu0 0.0
    %251 = vmatmul.mubr.f32.gmra.mrb[0].mxu0 %v129
    %v252 = vpop.f32.mrb[0].mxu0
    %v253 = vadd.f32 %v110, %v252
    %v254 = vpop.f32.mrb[0].mxu0
    %255 = vmatprep.mubr.f32.mxu0 0.0
    %256 = vmatmul.mubr.f32.gmra.mrb[0].mxu0 %v132
    %v257 = vpop.f32.mrb[0].mxu0
    %v258 = vadd.f32 %v110, %v257
    %v259 = vpop.f32.mrb[0].mxu0
    %260 = vmatprep.mubr.f32.mxu0 0.0
    %261 = vmatmul.mubr.f32.gmra.mrb[0].mxu0 %v135
    %v262 = vpop.f32.mrb[0].mxu0
    %v263 = vadd.f32 %v110, %v262
    %v264 = vpop.f32.mrb[0].mxu0
    %265 = vmatprep.mubr.f32.mxu0 0.0
    %266 = vmatmul.mubr.f32.gmra.mrb[0].mxu0 %v138
    %v267 = vpop.f32.mrb[0].mxu0
    %v268 = vadd.f32 %v110, %v267
    %v269 = vpop.f32.mrb[0].mxu0
    %270 = vmatprep.mubr.f32.mxu0 0.0
    %271 = vmatmul.mubr.f32.gmra.mrb[0].mxu0 %v141
    %v272 = vpop.f32.mrb[0].mxu0
    %v273 = vadd.f32 %v110, %v272
    %v274 = vpop.f32.mrb[0].mxu0
    %275 = vmatprep.mubr.f32.mxu0 0.0
    %276 = vmatmul.mubr.f32.gmra.mrb[0].mxu0 %v144
    %v277 = vpop.f32.mrb[0].mxu0
    %v278 = vadd.f32 %v110, %v277
    %v279 = vpop.f32.mrb[0].mxu0
    %280 = vmatprep.mubr.f32.mxu0 0.0
    %281 = vmatmul.mubr.f32.gmra.mrb[0].mxu0 %v147
    %v282 = vpop.f32.mrb[0].mxu0
    %v283 = vadd.f32 %v110, %v282
    %v284 = vpop.f32.mrb[0].mxu0
    %285 = vmatprep.mubr.f32.mxu0 0.0
    %286 = vmatmul.mubr.f32.gmra.mrb[0].mxu0 %v150
    %v287 = vpop.f32.mrb[0].mxu0
    %v288 = vadd.f32 %v110, %v287
    %v289 = vpop.f32.mrb[0].mxu0
    %290 = vmatprep.mubr.f32.mxu0 0.0
    %291 = vmatmul.mubr.f32.gmra.mrb[0].mxu0 %v153
    %v292 = vpop.f32.mrb[0].mxu0
    %v293 = vadd.f32 %v110, %v292
    %v294 = vpop.f32.mrb[0].mxu0
    %295 = vmatprep.mubr.f32.mxu0 0.0
    %296 = vmatmul.mubr.f32.gmra.mrb[0].mxu0 %v156
    %v297 = vpop.f32.mrb[0].mxu0
    %v298 = vadd.f32 %v110, %v297
    %v299 = vpop.f32.mrb[0].mxu0
    %300 = vmatprep.mubr.f32.mxu0 0.0
    %301 = vmatmul.mubr.f32.gmra.mrb[0].mxu0 %v159
    %v302 = vpop.f32.mrb[0].mxu0
    %v303 = vadd.f32 %v110, %v302
    %v304 = vpop.f32.mrb[0].mxu0
    %305 = vdwg.mxu0
    %v306 = vmax.f32 %v228, 0.0
    %v307 = vmax.f32 %v233, 0.0
    %v308 = vmax.f32 %v238, 0.0
    %v309 = vmax.f32 %v243, 0.0
    %v310 = vmax.f32 %v248, 0.0
    %v311 = vmax.f32 %v253, 0.0
    %v312 = vmax.f32 %v258, 0.0
    %v313 = vmax.f32 %v263, 0.0
    %v314 = vmax.f32 %v268, 0.0
    %v315 = vmax.f32 %v273, 0.0
    %v316 = vmax.f32 %v278, 0.0
    %v317 = vmax.f32 %v283, 0.0
    %v318 = vmax.f32 %v288, 0.0
    %v319 = vmax.f32 %v293, 0.0
    %v320 = vmax.f32 %v298, 0.0
    %v321 = vmax.f32 %v303, 0.0
    %v322 = vld [vmem:[#allocation8] sm:$0xff]
    %v323 = vld [vmem:[#allocation8 + $0x8] sm:$0xff]
    %v324 = vld [vmem:[#allocation8 + $0x10] sm:$0xff]
    %v325 = vld [vmem:[#allocation8 + $0x18] sm:$0xff]
    %v326 = vld [vmem:[#allocation8 + $0x20] sm:$0xff]
    %v327 = vld [vmem:[#allocation8 + $0x28] sm:$0xff]
    %v328 = vld [vmem:[#allocation8 + $0x30] sm:$0xff]
    %v329 = vld [vmem:[#allocation8 + $0x38] sm:$0xff]
    %v330 = vld [vmem:[#allocation8 + $0x40] sm:$0xff]
    %v331 = vld [vmem:[#allocation8 + $0x48] sm:$0xff]
    %v332 = vld [vmem:[#allocation8 + $0x50] sm:$0xff]
    %v333 = vld [vmem:[#allocation8 + $0x58] sm:$0xff]
    %v334 = vld [vmem:[#allocation8 + $0x60] sm:$0xff]
    %v335 = vld [vmem:[#allocation8 + $0x68] sm:$0xff]
    %v336 = vld [vmem:[#allocation8 + $0x70] sm:$0xff]
    %v337 = vld [vmem:[#allocation8 + $0x78] sm:$0xff]
    %v338 = vld [vmem:[#allocation10] sm:$0x1]
    %v340 = vlaneseq
    %v341 = vshrl.u32 %v340, 7
    %v342 = vsub.s32 0, %v341
    %v343 = vrot.slane %v338, %v342
    %345 = vmatprep.subr.mxu0 0.0
    %346 = vmatpush1.msra.mxu0 %v322
    %347 = vmatprep.subr.mxu0 0.0
    %348 = vmatpush1.msra.mxu0 %v323
    %349 = vmatprep.subr.mxu0 0.0
    %350 = vmatpush1.msra.mxu0 %v324
    %351 = vmatprep.subr.mxu0 0.0
    %352 = vmatpush1.msra.mxu0 %v325
    %353 = vmatprep.subr.mxu0 0.0
    %354 = vmatpush1.msra.mxu0 %v326
    %355 = vmatprep.subr.mxu0 0.0
    %356 = vmatpush1.msra.mxu0 %v327
    %357 = vmatprep.subr.mxu0 0.0
    %358 = vmatpush1.msra.mxu0 %v328
    %359 = vmatprep.subr.mxu0 0.0
    %360 = vmatpush1.msra.mxu0 %v329
    %361 = vmatprep.subr.mxu0 0.0
    %362 = vmatpush1.msra.mxu0 %v330
    %363 = vmatprep.subr.mxu0 0.0
    %364 = vmatpush1.msra.mxu0 %v331
    %365 = vmatprep.subr.mxu0 0.0
    %366 = vmatpush1.msra.mxu0 %v332
    %367 = vmatprep.subr.mxu0 0.0
    %368 = vmatpush1.msra.mxu0 %v333
    %369 = vmatprep.subr.mxu0 0.0
    %370 = vmatpush1.msra.mxu0 %v334
    %371 = vmatprep.subr.mxu0 0.0
    %372 = vmatpush1.msra.mxu0 %v335
    %373 = vmatprep.subr.mxu0 0.0
    %374 = vmatpush1.msra.mxu0 %v336
    %375 = vmatprep.subr.mxu0 0.0
    %376 = vmatpush1.msra.mxu0 %v337
    %377 = vmatprep.subr.mxu0 0.0
    %378 = vmatpush1.msra.mxu0 0.0
    %379 = vmatprep.subr.mxu0 0.0
    %380 = vmatpush1.msra.mxu0 0.0
    %381 = vmatprep.subr.mxu0 0.0
    %382 = vmatpush1.msra.mxu0 0.0
    %383 = vmatprep.subr.mxu0 0.0
    %384 = vmatpush1.msra.mxu0 0.0
    %385 = vmatprep.subr.mxu0 0.0
    %386 = vmatpush1.msra.mxu0 0.0
    %387 = vmatprep.subr.mxu0 0.0
    %388 = vmatpush1.msra.mxu0 0.0
    %389 = vmatprep.subr.mxu0 0.0
    %390 = vmatpush1.msra.mxu0 0.0
    %391 = vmatprep.subr.mxu0 0.0
    %392 = vmatpush1.msra.mxu0 0.0
    %393 = vmatprep.subr.mxu0 0.0
    %394 = vmatpush1.msra.mxu0 0.0
    %395 = vmatprep.subr.mxu0 0.0
    %396 = vmatpush1.msra.mxu0 0.0
    %397 = vmatprep.subr.mxu0 0.0
    %398 = vmatpush1.msra.mxu0 0.0
    %399 = vmatprep.subr.mxu0 0.0
    %400 = vmatpush1.msra.mxu0 0.0
    %401 = vmatprep.subr.mxu0 0.0
    %402 = vmatpush1.msra.mxu0 0.0
    %403 = vmatprep.subr.mxu0 0.0
    %404 = vmatpush1.msra.mxu0 0.0
    %405 = vmatprep.subr.mxu0 0.0
    %406 = vmatpush1.msra.mxu0 0.0
    %407 = vmatprep.subr.mxu0 0.0
    %408 = vmatpush1.msra.mxu0 0.0
    %409 = vmatprep.mubr.f32.mxu0 0.0
    %410 = vmatmul.mubr.f32.gmra.mrb[0].mxu0 %v306
    %v411 = vpop.f32.mrb[0].mxu0
    %v412 = vadd.f32 %v343, %v411
    %v413 = vpop.f32.mrb[0].mxu0
    %414 = vmatprep.mubr.f32.mxu0 0.0
    %415 = vmatmul.mubr.f32.gmra.mrb[0].mxu0 %v307
    %v416 = vpop.f32.mrb[0].mxu0
    %v417 = vadd.f32 %v343, %v416
    %v418 = vpop.f32.mrb[0].mxu0
    %419 = vmatprep.mubr.f32.mxu0 0.0
    %420 = vmatmul.mubr.f32.gmra.mrb[0].mxu0 %v308
    %v421 = vpop.f32.mrb[0].mxu0
    %v422 = vadd.f32 %v343, %v421
    %v423 = vpop.f32.mrb[0].mxu0
    %424 = vmatprep.mubr.f32.mxu0 0.0
    %425 = vmatmul.mubr.f32.gmra.mrb[0].mxu0 %v309
    %v426 = vpop.f32.mrb[0].mxu0
    %v427 = vadd.f32 %v343, %v426
    %v428 = vpop.f32.mrb[0].mxu0
    %429 = vmatprep.mubr.f32.mxu0 0.0
    %430 = vmatmul.mubr.f32.gmra.mrb[0].mxu0 %v310
    %v431 = vpop.f32.mrb[0].mxu0
    %v432 = vadd.f32 %v343, %v431
    %v433 = vpop.f32.mrb[0].mxu0
    %434 = vmatprep.mubr.f32.mxu0 0.0
    %435 = vmatmul.mubr.f32.gmra.mrb[0].mxu0 %v311
    %v436 = vpop.f32.mrb[0].mxu0
    %v437 = vadd.f32 %v343, %v436
    %v438 = vpop.f32.mrb[0].mxu0
    %439 = vmatprep.mubr.f32.mxu0 0.0
    %440 = vmatmul.mubr.f32.gmra.mrb[0].mxu0 %v312
    %v441 = vpop.f32.mrb[0].mxu0
    %v442 = vadd.f32 %v343, %v441
    %v443 = vpop.f32.mrb[0].mxu0
    %444 = vmatprep.mubr.f32.mxu0 0.0
    %445 = vmatmul.mubr.f32.gmra.mrb[0].mxu0 %v313
    %v446 = vpop.f32.mrb[0].mxu0
    %v447 = vadd.f32 %v343, %v446
    %v448 = vpop.f32.mrb[0].mxu0
    %449 = vmatprep.mubr.f32.mxu0 0.0
    %450 = vmatmul.mubr.f32.gmra.mrb[0].mxu0 %v314
    %v451 = vpop.f32.mrb[0].mxu0
    %v452 = vadd.f32 %v343, %v451
    %v453 = vpop.f32.mrb[0].mxu0
    %454 = vmatprep.mubr.f32.mxu0 0.0
    %455 = vmatmul.mubr.f32.gmra.mrb[0].mxu0 %v315
    %v456 = vpop.f32.mrb[0].mxu0
    %v457 = vadd.f32 %v343, %v456
    %v458 = vpop.f32.mrb[0].mxu0
    %459 = vmatprep.mubr.f32.mxu0 0.0
    %460 = vmatmul.mubr.f32.gmra.mrb[0].mxu0 %v316
    %v461 = vpop.f32.mrb[0].mxu0
    %v462 = vadd.f32 %v343, %v461
    %v463 = vpop.f32.mrb[0].mxu0
    %464 = vmatprep.mubr.f32.mxu0 0.0
    %465 = vmatmul.mubr.f32.gmra.mrb[0].mxu0 %v317
    %v466 = vpop.f32.mrb[0].mxu0
    %v467 = vadd.f32 %v343, %v466
    %v468 = vpop.f32.mrb[0].mxu0
    %469 = vmatprep.mubr.f32.mxu0 0.0
    %470 = vmatmul.mubr.f32.gmra.mrb[0].mxu0 %v318
    %v471 = vpop.f32.mrb[0].mxu0
    %v472 = vadd.f32 %v343, %v471
    %v473 = vpop.f32.mrb[0].mxu0
    %474 = vmatprep.mubr.f32.mxu0 0.0
    %475 = vmatmul.mubr.f32.gmra.mrb[0].mxu0 %v319
    %v476 = vpop.f32.mrb[0].mxu0
    %v477 = vadd.f32 %v343, %v476
    %v478 = vpop.f32.mrb[0].mxu0
    %479 = vmatprep.mubr.f32.mxu0 0.0
    %480 = vmatmul.mubr.f32.gmra.mrb[0].mxu0 %v320
    %v481 = vpop.f32.mrb[0].mxu0
    %v482 = vadd.f32 %v343, %v481
    %v483 = vpop.f32.mrb[0].mxu0
    %484 = vmatprep.mubr.f32.mxu0 0.0
    %485 = vmatmul.mubr.f32.gmra.mrb[0].mxu0 %v321
    %v486 = vpop.f32.mrb[0].mxu0
    %v487 = vadd.f32 %v343, %v486
    %v488 = vpop.f32.mrb[0].mxu0
    %489 = vdwg.mxu0
    %v490 = vmax.f32 %v412, 0.0
    %v491 = vmax.f32 %v417, 0.0
    %v492 = vmax.f32 %v422, 0.0
    %v493 = vmax.f32 %v427, 0.0
    %v494 = vmax.f32 %v432, 0.0
    %v495 = vmax.f32 %v437, 0.0
    %v496 = vmax.f32 %v442, 0.0
    %v497 = vmax.f32 %v447, 0.0
    %v498 = vmax.f32 %v452, 0.0
    %v499 = vmax.f32 %v457, 0.0
    %v500 = vmax.f32 %v462, 0.0
    %v501 = vmax.f32 %v467, 0.0
    %v502 = vmax.f32 %v472, 0.0
    %v503 = vmax.f32 %v477, 0.0
    %v504 = vmax.f32 %v482, 0.0
    %v505 = vmax.f32 %v487, 0.0
    %506 = vst.msk [vmem:[#allocation11] sm:$0xff] %vm112, %v490
    %507 = vst.msk [vmem:[#allocation11 + $0x8] sm:$0xff] %vm112, %v491
    %508 = vst.msk [vmem:[#allocation11 + $0x10] sm:$0xff] %vm112, %v492
    %509 = vst.msk [vmem:[#allocation11 + $0x18] sm:$0xff] %vm112, %v493
    %510 = vst.msk [vmem:[#allocation11 + $0x20] sm:$0xff] %vm112, %v494
    %511 = vst.msk [vmem:[#allocation11 + $0x28] sm:$0xff] %vm112, %v495
    %512 = vst.msk [vmem:[#allocation11 + $0x30] sm:$0xff] %vm112, %v496
    %513 = vst.msk [vmem:[#allocation11 + $0x38] sm:$0xff] %vm112, %v497
    %514 = vst.msk [vmem:[#allocation11 + $0x40] sm:$0xff] %vm112, %v498
    %515 = vst.msk [vmem:[#allocation11 + $0x48] sm:$0xff] %vm112, %v499
    %516 = vst.msk [vmem:[#allocation11 + $0x50] sm:$0xff] %vm112, %v500
    %517 = vst.msk [vmem:[#allocation11 + $0x58] sm:$0xff] %vm112, %v501
    %518 = vst.msk [vmem:[#allocation11 + $0x60] sm:$0xff] %vm112, %v502
    %519 = vst.msk [vmem:[#allocation11 + $0x68] sm:$0xff] %vm112, %v503
    %520 = vst.msk [vmem:[#allocation11 + $0x70] sm:$0xff] %vm112, %v504
    %521 = vst.msk [vmem:[#allocation11 + $0x78] sm:$0xff] %vm112, %v505
    // Predicated region
    $region42: #{mlp_forward_fused.1} parent=1 // pred_check
      _
    $region43: #{mlp_forward_fused.1} parent=1 // pred_check_branch
      %523 = sbr.rel (0) target = $region45
    $region44: #{mlp_forward_fused.1} parent=1 // pred_region
      %s525 = ssub.s32 2048, 2048
      %526 = vsyncadd [#allocation4], %s525
      %s527 = sshll.u32 [#allocation11], 4
      %s528 = int_to_ptr.vmem [resolvable:$true] %s527
      %533 = dma.vmem_to_hbm [thread:$0]  %s528, 2048, %s5, [#allocation4], 128, 128, 8
    $region45: #{mlp_forward_fused.1} parent=1 // pred_fallthru
      _
    // Predicated region
    $region46: #{mlp_forward_fused.1} parent=1 // pred_check
      _
    $region47: #{mlp_forward_fused.1} parent=1 // pred_check_branch
      %535 = sbr.rel (0) target = $region49
    $region48: #{mlp_forward_fused.1} parent=1 // pred_region
      %536 = dma.done [#allocation4], 2048
    $region49: #{mlp_forward_fused.1} parent=1 // pred_fallthru
      _
    %537 = vsyncpa [#allocation3], 1
    %538 = vsyncpa [#allocation6], 1
    %539 = vsyncpa [#allocation9], 1
    %540 = vsyncpa [#allocation4], 1

</llo_original>
